<compile_context>
chip_gen: v6e
topology: v6e:2x2x1
jax: 0.10.0
libtpu: 0.0.40
codegen_flags: <defaults>
</compile_context>

<pallas_src>
import functools

import jax
import jax.numpy as jnp
from jax import lax
from jax.experimental import pallas as pl
from jax.experimental.pallas import tpu as pltpu


def _round_up(x, m):
    return ((x + m - 1) // m) * m


def _qensemble_kernel(obs_ref, act_ref, w1o_ref, w1a_ref, b1_ref,
                      w2_ref, b2_ref, w3t_ref, b3t_ref, o_ref):
    # Layer 1 (batch-major): torch.cat([obs, act]) @ W1 fused as two dots.
    h1 = (jnp.dot(obs_ref[...], w1o_ref[...], preferred_element_type=jnp.float32)
          + jnp.dot(act_ref[...], w1a_ref[...], preferred_element_type=jnp.float32)
          + b1_ref[...])
    h1 = jnp.maximum(h1, 0.0)

    # Layer 2 (batch-major): block-diagonal (MH, MH) keeps the M models independent.
    h2 = jnp.dot(h1, w2_ref[...], preferred_element_type=jnp.float32) + b2_ref[...]
    h2 = jnp.maximum(h2, 0.0)

    # Layer 3 (feature-major): contract MH of both operands -> (M, tb) so the
    # batch tile lands on lanes and the final store is lane-dense.
    logits = lax.dot_general(
        w3t_ref[...], h2,
        dimension_numbers=(((1,), (1,)), ((), ())),
        preferred_element_type=jnp.float32) + b3t_ref[...]
    q = jax.nn.sigmoid(logits)                                   # (M, tb) per-model Q

    # Ensemble mean over the M sublanes (XLU reduce, free slot), one dense store.
    num_models = q.shape[0]
    q_mean = jnp.sum(q, axis=0, keepdims=True) * (1.0 / num_models)   # (1, tb)
    o_ref[...] = q_mean.reshape(o_ref.shape).astype(o_ref.dtype)


def pack_params(params, obs_dim):
    """Fold the ensemble dim into the lane dim and split W1 for cat-fusion (done once)."""
    w1, b1 = params["w1"], params["b1"]
    w2, b2 = params["w2"], params["b2"]
    w3, b3 = params["w3"], params["b3"]
    M, D, H = w1.shape
    MH = M * H
    eye = jnp.eye(M, dtype=w1.dtype)

    # Layer 1 split into obs / act halves (fuses torch.cat into the kernel).
    w1o = jnp.transpose(w1[:, :obs_dim, :], (1, 0, 2)).reshape(obs_dim, MH)
    w1a = jnp.transpose(w1[:, obs_dim:, :], (1, 0, 2)).reshape(D - obs_dim, MH)
    b1w = b1.reshape(1, MH)
    # Block-diagonal: W2w[m*H+i, n*H+j] = w2[m, i, j] * (m == n).
    w2w = jnp.einsum("mn,mij->minj", eye, w2).reshape(MH, MH)
    b2w = b2.reshape(1, MH)
    # Layer 3, feature-major: W3t[m, n*H+h] = w3[n, h, 0] * (m == n).
    w3t = jnp.einsum("mn,nh->mnh", eye, w3[:, :, 0]).reshape(M, MH)
    b3t = b3.reshape(M, 1)
    return {"w1o": w1o, "w1a": w1a, "b1": b1w, "w2": w2w, "b2": b2w,
            "w3t": w3t, "b3t": b3t}


@functools.partial(jax.jit, static_argnames=("max_batch_tile", "cast_inputs_bf16"))
def qensemble_forward(obs, act, packed, *, max_batch_tile=2048,
                      cast_inputs_bf16=False):
    """obs: (B, obs_dim), act: (B, act_dim). Returns (B,) mean-over-models Q."""
    B, obs_dim = obs.shape
    act_dim = act.shape[1]
    MH = packed["w1o"].shape[1]
    M = packed["w3t"].shape[0]

    # bf16 streamed activations halve the dominant HBM traffic once large B
    # makes this bandwidth-bound (accumulation stays f32 in the kernel).
    # Default off so the f32 reference check below stays tight.
    in_dtype = jnp.bfloat16 if cast_inputs_bf16 else jnp.float32
    obs = obs.astype(in_dtype)
    act = act.astype(in_dtype)

    # Adaptive batch tiling: pad only to the next multiple of 8, cap the tile
    # at max_batch_tile rows (few grid steps for big B), and give v7x's two
    # TensorCores at least two "parallel" tiles once there is enough work.
    nb = pl.cdiv(B, max_batch_tile)
    if nb == 1 and B >= 1024:
        nb = 2
    tb = _round_up(pl.cdiv(B, nb), 8)
    nb = pl.cdiv(B, tb)
    Bp = nb * tb
    if Bp != B:
        obs = jnp.pad(obs, ((0, Bp - B), (0, 0)))
        act = jnp.pad(act, ((0, Bp - B), (0, 0)))

    q_tiles = pl.pallas_call(
        _qensemble_kernel,
        out_shape=jax.ShapeDtypeStruct((nb, 1, tb), jnp.float32),
        grid_spec=pltpu.PrefetchScalarGridSpec(
            num_scalar_prefetch=0,
            grid=(nb,),
            in_specs=[
                pl.BlockSpec((tb, obs_dim), lambda i: (i, 0)),   # obs batch tile
                pl.BlockSpec((tb, act_dim), lambda i: (i, 0)),   # act batch tile
                pl.BlockSpec((obs_dim, MH), lambda i: (0, 0)),   # W1 obs half (resident)
                pl.BlockSpec((act_dim, MH), lambda i: (0, 0)),   # W1 act half (resident)
                pl.BlockSpec((1, MH), lambda i: (0, 0)),         # b1
                pl.BlockSpec((MH, MH), lambda i: (0, 0)),        # W2 block-diagonal
                pl.BlockSpec((1, MH), lambda i: (0, 0)),         # b2
                pl.BlockSpec((M, MH), lambda i: (0, 0)),         # W3^T block-structured
                pl.BlockSpec((M, 1), lambda i: (0, 0)),          # b3^T
            ],
            out_specs=pl.BlockSpec((1, 1, tb), lambda i: (i, 0, 0)),
        ),
        compiler_params=pltpu.CompilerParams(
            dimension_semantics=("parallel",),   # batch tiles are independent
        ),
    )(obs, act, packed["w1o"], packed["w1a"], packed["b1"],
      packed["w2"], packed["b2"], packed["w3t"], packed["b3t"])

    # Pad rows (zeros -> sigmoid(b3)=0.5) are dropped here, before any use.
    return q_tiles.reshape(-1)[:B]


def init_params(key, obs_dim, act_dim, hidden_size, num_models):
    """Xavier-uniform (gain=sqrt(2), matching nn.init.calculate_gain('relu')), zero biases."""
    D = obs_dim + act_dim
    H = hidden_size
    gain = jnp.sqrt(2.0)

    def xavier(k, fan_in, fan_out, shape):
        limit = gain * jnp.sqrt(6.0 / (fan_in + fan_out))
        return jax.random.uniform(k, shape, jnp.float32, -limit, limit)

    k1, k2, k3 = jax.random.split(key, 3)
    return {
        "w1": xavier(k1, D, H, (num_models, D, H)),
        "b1": jnp.zeros((num_models, 1, H), jnp.float32),
        "w2": xavier(k2, H, H, (num_models, H, H)),
        "b2": jnp.zeros((num_models, 1, H), jnp.float32),
        "w3": xavier(k3, H, 1, (num_models, H, 1)),
        "b3": jnp.zeros((num_models, 1, 1), jnp.float32),
    }


def _reference_forward(obs, act, params):
    """Pure-JAX reference matching the PyTorch qEnsemble forward."""
    x = jnp.concatenate([obs, act], axis=-1).astype(jnp.float32)
    qs = []
    for m in range(params["w1"].shape[0]):
        h1 = jnp.maximum(x @ params["w1"][m] + params["b1"][m], 0.0)
        h2 = jnp.maximum(h1 @ params["w2"][m] + params["b2"][m], 0.0)
        q = jax.nn.sigmoid(h2 @ params["w3"][m] + params["b3"][m])
        qs.append(q[:, 0])
    return jnp.stack(qs, axis=0).mean(axis=0)


# TODO(synk): qEnsemble.safety() (global min over per-model Q) is not part of forward()
# and is not implemented here.

if __name__ == "__main__":
    obs_dim, act_dim, hidden_size, num_models = 12, 4, 32, 3
    batch = 8

    key = jax.random.PRNGKey(0)
    k_obs, k_act, k_params, k_obs2, k_act2 = jax.random.split(key, 5)

    obs = jax.random.normal(k_obs, (batch, obs_dim), jnp.float32)
    act = jax.random.normal(k_act, (batch, act_dim), jnp.float32)
    params = init_params(k_params, obs_dim, act_dim, hidden_size, num_models)
    packed = pack_params(params, obs_dim)

    # Small batch: single grid step, everything VMEM-resident.
    q = qensemble_forward(obs, act, packed)
    jax.block_until_ready(q)
    q_ref = _reference_forward(obs, act, params)
    assert q.shape == (batch,)
    assert jnp.allclose(q, q_ref, atol=5e-5, rtol=5e-5), \
        float(jnp.max(jnp.abs(q - q_ref)))

    # Larger, non-multiple-of-8 batch: pads 300 -> 304 (not 512), slices back.
    big_batch = 300
    obs_b = jax.random.normal(k_obs2, (big_batch, obs_dim), jnp.float32)
    act_b = jax.random.normal(k_act2, (big_batch, act_dim), jnp.float32)
    q_b = qensemble_forward(obs_b, act_b, packed)
    jax.block_until_ready(q_b)
    q_b_ref = _reference_forward(obs_b, act_b, params)
    assert q_b.shape == (big_batch,)
    assert jnp.allclose(q_b, q_b_ref, atol=5e-5, rtol=5e-5), \
        float(jnp.max(jnp.abs(q_b - q_b_ref)))

    # Force the multi-tile "parallel" grid path (nb > 1) on the same data.
    q_mt = qensemble_forward(obs_b, act_b, packed, max_batch_tile=128)
    jax.block_until_ready(q_mt)
    assert jnp.allclose(q_mt, q_b_ref, atol=5e-5, rtol=5e-5), \
        float(jnp.max(jnp.abs(q_mt - q_b_ref)))

    print("KERNEL_OK")
</pallas_src>

<mosaic_0001>
module attributes {stable_mosaic.version = 11 : i64} {
  func.func @_qensemble_kernel(%arg0: i32, %arg1: memref<8x12xf32, #tpu.memory_space<vmem>>, %arg2: memref<8x4xf32, #tpu.memory_space<vmem>>, %arg3: memref<12x96xf32, #tpu.memory_space<vmem>>, %arg4: memref<4x96xf32, #tpu.memory_space<vmem>>, %arg5: memref<1x96xf32, #tpu.memory_space<vmem>>, %arg6: memref<96x96xf32, #tpu.memory_space<vmem>>, %arg7: memref<1x96xf32, #tpu.memory_space<vmem>>, %arg8: memref<3x96xf32, #tpu.memory_space<vmem>>, %arg9: memref<3x1xf32, #tpu.memory_space<vmem>>, %arg10: memref<1x1x8xf32, #tpu.memory_space<vmem>>) attributes {dimension_semantics = [#tpu.dimension_semantics<parallel>], iteration_bounds = array<i64: 1>, scalar_prefetch = 0 : i64, scratch_operands = 0 : i64, tpu.core_type = #tpu.core_type<tc>, window_params = [{transform_indices = @transform_0, window_bounds = array<i64: 8, 12>}, {transform_indices = @transform_1, window_bounds = array<i64: 8, 4>}, {pipeline_mode = #tpu.pipeline_mode<synchronous>, transform_indices = @transform_2, window_bounds = array<i64: 12, 96>}, {pipeline_mode = #tpu.pipeline_mode<synchronous>, transform_indices = @transform_3, window_bounds = array<i64: 4, 96>}, {pipeline_mode = #tpu.pipeline_mode<synchronous>, transform_indices = @transform_4, window_bounds = array<i64: 1, 96>}, {pipeline_mode = #tpu.pipeline_mode<synchronous>, transform_indices = @transform_5, window_bounds = array<i64: 96, 96>}, {pipeline_mode = #tpu.pipeline_mode<synchronous>, transform_indices = @transform_6, window_bounds = array<i64: 1, 96>}, {pipeline_mode = #tpu.pipeline_mode<synchronous>, transform_indices = @transform_7, window_bounds = array<i64: 3, 96>}, {pipeline_mode = #tpu.pipeline_mode<synchronous>, transform_indices = @transform_8, window_bounds = array<i64: 3, 1>}, {transform_indices = @transform_9, window_bounds = array<i64: 1, 1, 8>}]} {
    %c0 = arith.constant 0 : index
    %c0_0 = arith.constant 0 : index
    %0 = vector.load %arg1[%c0, %c0_0] : memref<8x12xf32, #tpu.memory_space<vmem>>, vector<8x12xf32>
    %c0_1 = arith.constant 0 : index
    %c0_2 = arith.constant 0 : index
    %1 = vector.load %arg3[%c0_1, %c0_2] : memref<12x96xf32, #tpu.memory_space<vmem>>, vector<12x96xf32>
    %cst = arith.constant dense<0.000000e+00> : vector<8x96xf32>
    %2 = tpu.matmul %0, %1, %cst {dimension_numbers = #tpu.dot_dimension_numbers<[1], [0], [0], [1], [0, 0, 1, 1], [], []>} : vector<8x12xf32>, vector<12x96xf32>, vector<8x96xf32> -> vector<8x96xf32>
    %c0_3 = arith.constant 0 : index
    %c0_4 = arith.constant 0 : index
    %3 = vector.load %arg2[%c0_3, %c0_4] : memref<8x4xf32, #tpu.memory_space<vmem>>, vector<8x4xf32>
    %c0_5 = arith.constant 0 : index
    %c0_6 = arith.constant 0 : index
    %4 = vector.load %arg4[%c0_5, %c0_6] : memref<4x96xf32, #tpu.memory_space<vmem>>, vector<4x96xf32>
    %cst_7 = arith.constant dense<0.000000e+00> : vector<8x96xf32>
    %5 = tpu.matmul %3, %4, %cst_7 {dimension_numbers = #tpu.dot_dimension_numbers<[1], [0], [0], [1], [0, 0, 1, 1], [], []>} : vector<8x4xf32>, vector<4x96xf32>, vector<8x96xf32> -> vector<8x96xf32>
    %6 = arith.addf %2, %5 : vector<8x96xf32>
    %c0_8 = arith.constant 0 : index
    %c0_9 = arith.constant 0 : index
    %7 = vector.load %arg5[%c0_8, %c0_9] : memref<1x96xf32, #tpu.memory_space<vmem>>, vector<1x96xf32>
    %8 = vector.broadcast %7 : vector<1x96xf32> to vector<8x96xf32>
    %9 = arith.addf %6, %8 : vector<8x96xf32>
    %cst_10 = arith.constant 0.000000e+00 : f32
    %10 = vector.broadcast %cst_10 : f32 to vector<8x96xf32>
    %11 = arith.maximumf %9, %10 : vector<8x96xf32>
    %c0_11 = arith.constant 0 : index
    %c0_12 = arith.constant 0 : index
    %12 = vector.load %arg6[%c0_11, %c0_12] : memref<96x96xf32, #tpu.memory_space<vmem>>, vector<96x96xf32>
    %cst_13 = arith.constant dense<0.000000e+00> : vector<8x96xf32>
    %13 = tpu.matmul %11, %12, %cst_13 {dimension_numbers = #tpu.dot_dimension_numbers<[1], [0], [0], [1], [0, 0, 1, 1], [], []>} : vector<8x96xf32>, vector<96x96xf32>, vector<8x96xf32> -> vector<8x96xf32>
    %c0_14 = arith.constant 0 : index
    %c0_15 = arith.constant 0 : index
    %14 = vector.load %arg7[%c0_14, %c0_15] : memref<1x96xf32, #tpu.memory_space<vmem>>, vector<1x96xf32>
    %15 = vector.broadcast %14 : vector<1x96xf32> to vector<8x96xf32>
    %16 = arith.addf %13, %15 : vector<8x96xf32>
    %cst_16 = arith.constant 0.000000e+00 : f32
    %17 = vector.broadcast %cst_16 : f32 to vector<8x96xf32>
    %18 = arith.maximumf %16, %17 : vector<8x96xf32>
    %c0_17 = arith.constant 0 : index
    %c0_18 = arith.constant 0 : index
    %19 = vector.load %arg8[%c0_17, %c0_18] : memref<3x96xf32, #tpu.memory_space<vmem>>, vector<3x96xf32>
    %cst_19 = arith.constant dense<0.000000e+00> : vector<3x8xf32>
    %20 = tpu.matmul %19, %18, %cst_19 {dimension_numbers = #tpu.dot_dimension_numbers<[1], [1], [0], [0], [0, 0, 1, 0], [], []>} : vector<3x96xf32>, vector<8x96xf32>, vector<3x8xf32> -> vector<3x8xf32>
    %c0_20 = arith.constant 0 : index
    %c0_21 = arith.constant 0 : index
    %21 = vector.load %arg9[%c0_20, %c0_21] : memref<3x1xf32, #tpu.memory_space<vmem>>, vector<3x1xf32>
    %22 = vector.broadcast %21 : vector<3x1xf32> to vector<3x8xf32>
    %23 = arith.addf %20, %22 : vector<3x8xf32>
    %24 = arith.negf %23 : vector<3x8xf32>
    %25 = math.exp %24 : vector<3x8xf32>
    %cst_22 = arith.constant 1.000000e+00 : f32
    %26 = vector.broadcast %cst_22 : f32 to vector<3x8xf32>
    %27 = arith.addf %26, %25 : vector<3x8xf32>
    %28 = arith.divf %26, %27 : vector<3x8xf32>
    %cst_23 = arith.constant dense<0.000000e+00> : vector<8xf32>
    %29 = vector.multi_reduction <add>, %28, %cst_23 [0] : vector<3x8xf32> to vector<8xf32>
    %30 = vector.shape_cast %29 : vector<8xf32> to vector<1x8xf32>
    %cst_24 = arith.constant 0.333333343 : f32
    %31 = vector.broadcast %cst_24 : f32 to vector<1x8xf32>
    %32 = arith.mulf %30, %31 : vector<1x8xf32>
    %33 = vector.shape_cast %32 : vector<1x8xf32> to vector<1x1x8xf32>
    %c0_25 = arith.constant 0 : index
    %c0_26 = arith.constant 0 : index
    %c0_27 = arith.constant 0 : index
    %34 = vector.load %arg10[%c0_25, %c0_26, %c0_27] : memref<1x1x8xf32, #tpu.memory_space<vmem>>, vector<1x1x8xf32>
    tpu.vector_store %arg10[%c0_25, %c0_26, %c0_27], %33 {strides = array<i32>} : memref<1x1x8xf32, #tpu.memory_space<vmem>>, vector<1x1x8xf32>,
    return
  }
  func.func @transform_0(%arg0: i32) -> (i32, i32) {
    %c0_i32 = arith.constant 0 : i32
    %c0_i32_0 = arith.constant 0 : i32
    return %arg0, %c0_i32 : i32, i32
  }
  func.func @transform_1(%arg0: i32) -> (i32, i32) {
    %c0_i32 = arith.constant 0 : i32
    %c0_i32_0 = arith.constant 0 : i32
    return %arg0, %c0_i32 : i32, i32
  }
  func.func @transform_2(%arg0: i32) -> (i32, i32) {
    %c0_i32 = arith.constant 0 : i32
    %c0_i32_0 = arith.constant 0 : i32
    %c0_i32_1 = arith.constant 0 : i32
    return %c0_i32, %c0_i32_0 : i32, i32
  }
  func.func @transform_3(%arg0: i32) -> (i32, i32) {
    %c0_i32 = arith.constant 0 : i32
    %c0_i32_0 = arith.constant 0 : i32
    %c0_i32_1 = arith.constant 0 : i32
    return %c0_i32, %c0_i32_0 : i32, i32
  }
  func.func @transform_4(%arg0: i32) -> (i32, i32) {
    %c0_i32 = arith.constant 0 : i32
    %c0_i32_0 = arith.constant 0 : i32
    %c0_i32_1 = arith.constant 0 : i32
    return %c0_i32, %c0_i32_0 : i32, i32
  }
  func.func @transform_5(%arg0: i32) -> (i32, i32) {
    %c0_i32 = arith.constant 0 : i32
    %c0_i32_0 = arith.constant 0 : i32
    %c0_i32_1 = arith.constant 0 : i32
    return %c0_i32, %c0_i32_0 : i32, i32
  }
  func.func @transform_6(%arg0: i32) -> (i32, i32) {
    %c0_i32 = arith.constant 0 : i32
    %c0_i32_0 = arith.constant 0 : i32
    %c0_i32_1 = arith.constant 0 : i32
    return %c0_i32, %c0_i32_0 : i32, i32
  }
  func.func @transform_7(%arg0: i32) -> (i32, i32) {
    %c0_i32 = arith.constant 0 : i32
    %c0_i32_0 = arith.constant 0 : i32
    %c0_i32_1 = arith.constant 0 : i32
    return %c0_i32, %c0_i32_0 : i32, i32
  }
  func.func @transform_8(%arg0: i32) -> (i32, i32) {
    %c0_i32 = arith.constant 0 : i32
    %c0_i32_0 = arith.constant 0 : i32
    %c0_i32_1 = arith.constant 0 : i32
    return %c0_i32, %c0_i32_0 : i32, i32
  }
  func.func @transform_9(%arg0: i32) -> (i32, i32, i32) {
    %c0_i32 = arith.constant 0 : i32
    %c0_i32_0 = arith.constant 0 : i32
    %c0_i32_1 = arith.constant 0 : i32
    return %arg0, %c0_i32, %c0_i32_0 : i32, i32, i32
  }
}

</mosaic_0001>

<llo_original>
// kernel: qensemble_forward.1
$region0: #{qensemble_forward.1}
  #allocation0 [shape = 'u32[]', space=smem, size = 0x4, offset = 0x4, fixed_abs, tag = 'smem constant byte address 0x4 - core index']
  #allocation1 [shape = 'u32[144,128]{1,0:T(1,128)}', space=vmem, size = 0x12000, scoped, tag = 'internal scratch']
  %s0 = inlined_call_operand.vmem [shape: f32[8,12], index: 0, kind: input, shape index: {}]
  %s1 = inlined_call_operand.vmem [shape: f32[8,4], index: 1, kind: input, shape index: {}]
  %s2 = inlined_call_operand.vmem [shape: f32[12,96], index: 2, kind: input, shape index: {}]
  %s3 = inlined_call_operand.hbm [shape: f32[4,96], index: 3, kind: input, shape index: {}]
  %s4 = inlined_call_operand.vmem [shape: f32[1,96], index: 4, kind: input, shape index: {}]
  %s5 = inlined_call_operand.hbm [shape: f32[96,96], index: 5, kind: input, shape index: {}]
  %s6 = inlined_call_operand.hbm [shape: f32[1,96], index: 6, kind: input, shape index: {}]
  %s7 = inlined_call_operand.vmem [shape: f32[3,96], index: 7, kind: input, shape index: {}]
  %s8 = inlined_call_operand.vmem [shape: f32[3,1], index: 8, kind: input, shape index: {}]
  %s9 = inlined_call_operand.hbm [shape: f32[1,1,8], index: 9, kind: output, shape index: {}]
  %s10 = sld [smem:[#allocation0]]
  $region58: #{qensemble_forward.1} parent=0
    _
  %s12 = ssub.s32 1, %s10
  %s13 = scalar_select 0, %s12, %s10
  $region1: #{qensemble_forward.1} parent=0
    #allocation2 [shape = 'u8[2048]{0}', space=vmem, size = 0x800, scoped, tag = 'input window, operand 3, single buffered']
    #allocation3 [shape = 's32[1]{0}', space=sflag, size = 0x4, scoped, tag = 'scoped memory for qensemble_forward.1']
    #allocation4 [shape = 's32[1]{0}', space=sflag, size = 0x4, scoped, tag = 'scoped memory for qensemble_forward.1']
    #allocation5 [shape = 'u8[49152]{0}', space=vmem, size = 0xc000, scoped, tag = 'input window, operand 5, single buffered']
    #allocation6 [shape = 's32[1]{0}', space=sflag, size = 0x4, scoped, tag = 'scoped memory for qensemble_forward.1']
    #allocation7 [shape = 'u8[512]{0}', space=vmem, size = 0x400, scoped, tag = 'input window, operand 6, single buffered']
    #allocation8 [shape = 'u8[512]{0}', space=vmem, size = 0x400, scoped, tag = 'output window, operand 0, single buffered']
    %14 = vsyncpa [#allocation3], 0
    %15 = vsyncpa [#allocation6], 0
    %16 = vsyncpa [#allocation4], 0
    // Predicated region
    $region2: #{qensemble_forward.1} parent=1 // pred_check
      _
    $region3: #{qensemble_forward.1} parent=1 // pred_check_branch
      %18 = sbr.rel (0) target = $region5
    $region4: #{qensemble_forward.1} parent=1 // pred_region
      _
    $region5: #{qensemble_forward.1} parent=1 // pred_fallthru
      _
    // Predicated region
    $region6: #{qensemble_forward.1} parent=1 // pred_check
      _
    $region7: #{qensemble_forward.1} parent=1 // pred_check_branch
      %20 = sbr.rel (0) target = $region9
    $region8: #{qensemble_forward.1} parent=1 // pred_region
      _
    $region9: #{qensemble_forward.1} parent=1 // pred_fallthru
      _
    // Predicated region
    $region10: #{qensemble_forward.1} parent=1 // pred_check
      _
    $region11: #{qensemble_forward.1} parent=1 // pred_check_branch
      %22 = sbr.rel (0) target = $region13
    $region12: #{qensemble_forward.1} parent=1 // pred_region
      _
    $region13: #{qensemble_forward.1} parent=1 // pred_fallthru
      _
    // Predicated region
    $region14: #{qensemble_forward.1} parent=1 // pred_check
      _
    $region15: #{qensemble_forward.1} parent=1 // pred_check_branch
      %24 = sbr.rel (0) target = $region17
    $region16: #{qensemble_forward.1} parent=1 // pred_region
      %s26 = ssub.s32 64, 64
      %27 = vsyncadd [#allocation3], %s26
      %s29 = sshll.u32 [#allocation2], 4
      %s30 = int_to_ptr.vmem [resolvable:$true] %s29
      %32 = dma.hbm_to_vmem [thread:$0]  %s3, 64, %s30, [#allocation3]
    $region17: #{qensemble_forward.1} parent=1 // pred_fallthru
      _
    // Predicated region
    $region18: #{qensemble_forward.1} parent=1 // pred_check
      _
    $region19: #{qensemble_forward.1} parent=1 // pred_check_branch
      %34 = sbr.rel (0) target = $region21
    $region20: #{qensemble_forward.1} parent=1 // pred_region
      _
    $region21: #{qensemble_forward.1} parent=1 // pred_fallthru
      _
    // Predicated region
    $region22: #{qensemble_forward.1} parent=1 // pred_check
      _
    $region23: #{qensemble_forward.1} parent=1 // pred_check_branch
      %36 = sbr.rel (0) target = $region25
    $region24: #{qensemble_forward.1} parent=1 // pred_region
      %s38 = ssub.s32 1536, 1536
      %39 = vsyncadd [#allocation6], %s38
      %s40 = sshll.u32 [#allocation5], 4
      %s41 = int_to_ptr.vmem [resolvable:$true] %s40
      %46 = dma.hbm_to_vmem [thread:$0]  %s5, 1536, %s41, [#allocation6], 128, 128, 8
    $region25: #{qensemble_forward.1} parent=1 // pred_fallthru
      _
    // Predicated region
    $region26: #{qensemble_forward.1} parent=1 // pred_check
      _
    $region27: #{qensemble_forward.1} parent=1 // pred_check_branch
      %48 = sbr.rel (0) target = $region29
    $region28: #{qensemble_forward.1} parent=1 // pred_region
      %s50 = ssub.s32 16, 16
      %51 = vsyncadd [#allocation6], %s50
      %s53 = sshll.u32 [#allocation7], 4
      %s54 = int_to_ptr.vmem [resolvable:$true] %s53
      %56 = dma.hbm_to_vmem [thread:$0]  %s6, 16, %s54, [#allocation6]
    $region29: #{qensemble_forward.1} parent=1 // pred_fallthru
      _
    // Predicated region
    $region30: #{qensemble_forward.1} parent=1 // pred_check
      _
    $region31: #{qensemble_forward.1} parent=1 // pred_check_branch
      %58 = sbr.rel (0) target = $region33
    $region32: #{qensemble_forward.1} parent=1 // pred_region
      _
    $region33: #{qensemble_forward.1} parent=1 // pred_fallthru
      _
    // Predicated region
    $region34: #{qensemble_forward.1} parent=1 // pred_check
      _
    $region35: #{qensemble_forward.1} parent=1 // pred_check_branch
      %60 = sbr.rel (0) target = $region37
    $region36: #{qensemble_forward.1} parent=1 // pred_region
      _
    $region37: #{qensemble_forward.1} parent=1 // pred_fallthru
      _
    // Predicated region
    $region38: #{qensemble_forward.1} parent=1 // pred_check
      _
    $region39: #{qensemble_forward.1} parent=1 // pred_check_branch
      %62 = sbr.rel (0) target = $region41
    $region40: #{qensemble_forward.1} parent=1 // pred_region
      %63 = dma.done [#allocation3], 64
    $region41: #{qensemble_forward.1} parent=1 // pred_fallthru
      _
    // Predicated region
    $region42: #{qensemble_forward.1} parent=1 // pred_check
      _
    $region43: #{qensemble_forward.1} parent=1 // pred_check_branch
      %65 = sbr.rel (0) target = $region45
    $region44: #{qensemble_forward.1} parent=1 // pred_region
      %66 = dma.done [#allocation6], 1536
    $region45: #{qensemble_forward.1} parent=1 // pred_fallthru
      _
    // Predicated region
    $region46: #{qensemble_forward.1} parent=1 // pred_check
      _
    $region47: #{qensemble_forward.1} parent=1 // pred_check_branch
      %68 = sbr.rel (0) target = $region49
    $region48: #{qensemble_forward.1} parent=1 // pred_region
      %69 = dma.done [#allocation6], 16
    $region49: #{qensemble_forward.1} parent=1 // pred_fallthru
      _
    %v70 = vld [vmem:[%s0] sm:$0xff]
    %v71 = vld [vmem:[%s2] sm:$0xff]
    %v72 = vld [vmem:[%s2 + $0x8] sm:$0xf]
    %v73 = vld [vmem:[%s1] sm:$0xff]
    %v74 = vld [vmem:[#allocation2] sm:$0xf]
    %vm75 = vcmask 31744
    %v77 = vsel %vm75, %v73, 0
    %vm79 = vcmask 1043456
    %v81 = vsel %vm79, %v74, 0
    %83 = vmatprep.subr.mxu0 0.0
    %84 = vmatpush1.msra.mxu0 0.0
    %85 = vmatprep.subr.mxu0 0.0
    %86 = vmatpush1.msra.mxu0 0.0
    %87 = vmatprep.subr.mxu0 0.0
    %88 = vmatpush1.msra.mxu0 0.0
    %89 = vmatprep.subr.mxu0 0.0
    %90 = vmatpush1.msra.mxu0 0.0
    %91 = vmatprep.subr.mxu0 0.0
    %92 = vmatpush1.msra.mxu0 0.0
    %93 = vmatprep.subr.mxu0 0.0
    %94 = vmatpush1.msra.mxu0 0.0
    %95 = vmatprep.subr.mxu0 0.0
    %96 = vmatpush1.msra.mxu0 0.0
    %97 = vmatprep.subr.mxu0 0.0
    %98 = vmatpush1.msra.mxu0 0.0
    %99 = vmatprep.subr.mxu0 0.0
    %100 = vmatpush1.msra.mxu0 0.0
    %101 = vmatprep.subr.mxu0 0.0
    %102 = vmatpush1.msra.mxu0 0.0
    %103 = vmatprep.subr.mxu0 0.0
    %104 = vmatpush1.msra.mxu0 0.0
    %105 = vmatprep.subr.mxu0 0.0
    %106 = vmatpush1.msra.mxu0 0.0
    %107 = vmatprep.subr.mxu0 0.0
    %108 = vmatpush1.msra.mxu0 0.0
    %109 = vmatprep.subr.mxu0 0.0
    %110 = vmatpush1.msra.mxu0 0.0
    %111 = vmatprep.subr.mxu0 0.0
    %112 = vmatpush1.msra.mxu0 0.0
    %113 = vmatprep.subr.mxu0 0.0
    %114 = vmatpush1.msra.mxu0 %v81
    %115 = vmatprep.subr.mxu0 0.0
    %116 = vmatpush2.msra.mxu0 0.0
    %117 = vmatprep.subr.mxu0 0.0
    %118 = vmatpush2.msra.mxu0 0.0
    %119 = vmatprep.subr.mxu0 0.0
    %120 = vmatpush2.msra.mxu0 0.0
    %121 = vmatprep.subr.mxu0 0.0
    %122 = vmatpush2.msra.mxu0 0.0
    %123 = vmatprep.subr.mxu0 0.0
    %124 = vmatpush2.msra.mxu0 0.0
    %125 = vmatprep.subr.mxu0 0.0
    %126 = vmatpush2.msra.mxu0 0.0
    %127 = vmatprep.subr.mxu0 0.0
    %128 = vmatpush2.msra.mxu0 0.0
    %129 = vmatprep.subr.mxu0 0.0
    %130 = vmatpush2.msra.mxu0 0.0
    %131 = vmatprep.subr.mxu0 0.0
    %132 = vmatpush2.msra.mxu0 0.0
    %133 = vmatprep.subr.mxu0 0.0
    %134 = vmatpush2.msra.mxu0 0.0
    %135 = vmatprep.subr.mxu0 0.0
    %136 = vmatpush2.msra.mxu0 0.0
    %137 = vmatprep.subr.mxu0 0.0
    %138 = vmatpush2.msra.mxu0 0.0
    %139 = vmatprep.subr.mxu0 0.0
    %140 = vmatpush2.msra.mxu0 0.0
    %141 = vmatprep.subr.mxu0 0.0
    %142 = vmatpush2.msra.mxu0 0.0
    %143 = vmatprep.subr.mxu0 0.0
    %144 = vmatpush2.msra.mxu0 0.0
    %145 = vmatprep.subr.mxu0 0.0
    %146 = vmatpush2.msra.mxu0 0.0
    %147 = vmatprep.mubr.f32.mxu0 0.0
    %148 = vmatmul.mubr.f32.gmra.mxu0 %v77
    %v149 = vpop.f32.mrf.mxu0
    %v150 = vadd.f32 0.0, %v149
    %v151 = vpop.f32.mrf.mxu0
    %152 = vdwg.mxu0
    %vm153 = vcmask 97280
    %v155 = vsel %vm153, %v70, 0
    %v158 = vsel %vm79, %v72, 0
    %160 = vmatprep.subr.mxu0 0.0
    %161 = vmatpush1.msra.mxu0 0.0
    %162 = vmatprep.subr.mxu0 0.0
    %163 = vmatpush1.msra.mxu0 0.0
    %164 = vmatprep.subr.mxu0 0.0
    %165 = vmatpush1.msra.mxu0 0.0
    %166 = vmatprep.subr.mxu0 0.0
    %167 = vmatpush1.msra.mxu0 0.0
    %168 = vmatprep.subr.mxu0 0.0
    %169 = vmatpush1.msra.mxu0 0.0
    %170 = vmatprep.subr.mxu0 0.0
    %171 = vmatpush1.msra.mxu0 0.0
    %172 = vmatprep.subr.mxu0 0.0
    %173 = vmatpush1.msra.mxu0 0.0
    %174 = vmatprep.subr.mxu0 0.0
    %175 = vmatpush1.msra.mxu0 0.0
    %176 = vmatprep.subr.mxu0 0.0
    %177 = vmatpush1.msra.mxu0 0.0
    %178 = vmatprep.subr.mxu0 0.0
    %179 = vmatpush1.msra.mxu0 0.0
    %180 = vmatprep.subr.mxu0 0.0
    %181 = vmatpush1.msra.mxu0 0.0
    %182 = vmatprep.subr.mxu0 0.0
    %183 = vmatpush1.msra.mxu0 0.0
    %184 = vmatprep.subr.mxu0 0.0
    %185 = vmatpush1.msra.mxu0 0.0
    %186 = vmatprep.subr.mxu0 0.0
    %187 = vmatpush1.msra.mxu0 0.0
    %188 = vmatprep.subr.mxu0 0.0
    %189 = vmatpush1.msra.mxu0 %v158
    %190 = vmatprep.subr.mxu0 0.0
    %191 = vmatpush1.msra.mxu0 %v71
    %192 = vmatprep.subr.mxu0 0.0
    %193 = vmatpush2.msra.mxu0 0.0
    %194 = vmatprep.subr.mxu0 0.0
    %195 = vmatpush2.msra.mxu0 0.0
    %196 = vmatprep.subr.mxu0 0.0
    %197 = vmatpush2.msra.mxu0 0.0
    %198 = vmatprep.subr.mxu0 0.0
    %199 = vmatpush2.msra.mxu0 0.0
    %200 = vmatprep.subr.mxu0 0.0
    %201 = vmatpush2.msra.mxu0 0.0
    %202 = vmatprep.subr.mxu0 0.0
    %203 = vmatpush2.msra.mxu0 0.0
    %204 = vmatprep.subr.mxu0 0.0
    %205 = vmatpush2.msra.mxu0 0.0
    %206 = vmatprep.subr.mxu0 0.0
    %207 = vmatpush2.msra.mxu0 0.0
    %208 = vmatprep.subr.mxu0 0.0
    %209 = vmatpush2.msra.mxu0 0.0
    %210 = vmatprep.subr.mxu0 0.0
    %211 = vmatpush2.msra.mxu0 0.0
    %212 = vmatprep.subr.mxu0 0.0
    %213 = vmatpush2.msra.mxu0 0.0
    %214 = vmatprep.subr.mxu0 0.0
    %215 = vmatpush2.msra.mxu0 0.0
    %216 = vmatprep.subr.mxu0 0.0
    %217 = vmatpush2.msra.mxu0 0.0
    %218 = vmatprep.subr.mxu0 0.0
    %219 = vmatpush2.msra.mxu0 0.0
    %220 = vmatprep.subr.mxu0 0.0
    %221 = vmatpush2.msra.mxu0 0.0
    %222 = vmatprep.subr.mxu0 0.0
    %223 = vmatpush2.msra.mxu0 0.0
    %224 = vmatprep.mubr.f32.mxu0 0.0
    %225 = vmatmul.mubr.f32.gmra.mxu0 %v155
    %v226 = vpop.f32.mrf.mxu0
    %v227 = vadd.f32 %v150, %v226
    %v228 = vpop.f32.mrf.mxu0
    %229 = vdwg.mxu0
    %v230 = vld [vmem:[%s4] sm:$0x1]
    %v232 = vlaneseq
    %v233 = vshrl.u32 %v232, 7
    %v234 = vsub.s32 0, %v233
    %v235 = vrot.slane %v230, %v234
    %v237 = vadd.f32 %v227, %v235
    %v238 = vmax.f32 %v237, 0.0
    %v239 = vld [vmem:[#allocation5] sm:$0xff]
    %v240 = vld [vmem:[#allocation5 + $0x8] sm:$0xff]
    %v241 = vld [vmem:[#allocation5 + $0x10] sm:$0xff]
    %v242 = vld [vmem:[#allocation5 + $0x18] sm:$0xff]
    %v243 = vld [vmem:[#allocation5 + $0x20] sm:$0xff]
    %v244 = vld [vmem:[#allocation5 + $0x28] sm:$0xff]
    %v245 = vld [vmem:[#allocation5 + $0x30] sm:$0xff]
    %v246 = vld [vmem:[#allocation5 + $0x38] sm:$0xff]
    %v247 = vld [vmem:[#allocation5 + $0x40] sm:$0xff]
    %v248 = vld [vmem:[#allocation5 + $0x48] sm:$0xff]
    %v249 = vld [vmem:[#allocation5 + $0x50] sm:$0xff]
    %v250 = vld [vmem:[#allocation5 + $0x58] sm:$0xff]
    %v251 = vld [vmem:[#allocation7] sm:$0x1]
    %v253 = vlaneseq
    %v254 = vshrl.u32 %v253, 7
    %v255 = vsub.s32 0, %v254
    %v256 = vrot.slane %v251, %v255
    %vm258 = vcmask 785408
    %v260 = vsel %vm258, %v238, 0
    %262 = vmatprep.subr.mxu0 0.0
    %263 = vmatpush1.msra.mxu0 0.0
    %264 = vmatprep.subr.mxu0 0.0
    %265 = vmatpush1.msra.mxu0 0.0
    %266 = vmatprep.subr.mxu0 0.0
    %267 = vmatpush1.msra.mxu0 0.0
    %268 = vmatprep.subr.mxu0 0.0
    %269 = vmatpush1.msra.mxu0 0.0
    %270 = vmatprep.subr.mxu0 0.0
    %271 = vmatpush1.msra.mxu0 %v250
    %272 = vmatprep.subr.mxu0 0.0
    %273 = vmatpush1.msra.mxu0 %v249
    %274 = vmatprep.subr.mxu0 0.0
    %275 = vmatpush1.msra.mxu0 %v248
    %276 = vmatprep.subr.mxu0 0.0
    %277 = vmatpush1.msra.mxu0 %v247
    %278 = vmatprep.subr.mxu0 0.0
    %279 = vmatpush1.msra.mxu0 %v246
    %280 = vmatprep.subr.mxu0 0.0
    %281 = vmatpush1.msra.mxu0 %v245
    %282 = vmatprep.subr.mxu0 0.0
    %283 = vmatpush1.msra.mxu0 %v244
    %284 = vmatprep.subr.mxu0 0.0
    %285 = vmatpush1.msra.mxu0 %v243
    %286 = vmatprep.subr.mxu0 0.0
    %287 = vmatpush1.msra.mxu0 %v242
    %288 = vmatprep.subr.mxu0 0.0
    %289 = vmatpush1.msra.mxu0 %v241
    %290 = vmatprep.subr.mxu0 0.0
    %291 = vmatpush1.msra.mxu0 %v240
    %292 = vmatprep.subr.mxu0 0.0
    %293 = vmatpush1.msra.mxu0 %v239
    %294 = vmatprep.subr.mxu0 0.0
    %295 = vmatpush2.msra.mxu0 0.0
    %296 = vmatprep.subr.mxu0 0.0
    %297 = vmatpush2.msra.mxu0 0.0
    %298 = vmatprep.subr.mxu0 0.0
    %299 = vmatpush2.msra.mxu0 0.0
    %300 = vmatprep.subr.mxu0 0.0
    %301 = vmatpush2.msra.mxu0 0.0
    %302 = vmatprep.subr.mxu0 0.0
    %303 = vmatpush2.msra.mxu0 0.0
    %304 = vmatprep.subr.mxu0 0.0
    %305 = vmatpush2.msra.mxu0 0.0
    %306 = vmatprep.subr.mxu0 0.0
    %307 = vmatpush2.msra.mxu0 0.0
    %308 = vmatprep.subr.mxu0 0.0
    %309 = vmatpush2.msra.mxu0 0.0
    %310 = vmatprep.subr.mxu0 0.0
    %311 = vmatpush2.msra.mxu0 0.0
    %312 = vmatprep.subr.mxu0 0.0
    %313 = vmatpush2.msra.mxu0 0.0
    %314 = vmatprep.subr.mxu0 0.0
    %315 = vmatpush2.msra.mxu0 0.0
    %316 = vmatprep.subr.mxu0 0.0
    %317 = vmatpush2.msra.mxu0 0.0
    %318 = vmatprep.subr.mxu0 0.0
    %319 = vmatpush2.msra.mxu0 0.0
    %320 = vmatprep.subr.mxu0 0.0
    %321 = vmatpush2.msra.mxu0 0.0
    %322 = vmatprep.subr.mxu0 0.0
    %323 = vmatpush2.msra.mxu0 0.0
    %324 = vmatprep.subr.mxu0 0.0
    %325 = vmatpush2.msra.mxu0 0.0
    %326 = vmatprep.mubr.f32.mxu0 0.0
    %327 = vmatmul.mubr.f32.gmra.mxu0 %v260
    %v328 = vpop.f32.mrf.mxu0
    %v329 = vadd.f32 %v256, %v328
    %v330 = vpop.f32.mrf.mxu0
    %331 = vdwg.mxu0
    %v332 = vmax.f32 %v329, 0.0
    %v333 = vld [vmem:[%s7] sm:$0x7]
    %v334 = vld [vmem:[%s8] sm:$0x7]
    %336 = vset.pattern.permute.xlu0 0
    %337 = vperm.xlu0 %336, %v334
    %v338 = vpop.permute.xlu0 %337
    %v341 = vsel %vm258, %v333, 0
    %v344 = vsel %vm258, %v332, 0
    %346 = vmatprep.subr.mxu0 0.0
    %347 = vmatpush1.xpose.msra.mxu0 0.0
    %348 = vmatprep.subr.mxu0 0.0
    %349 = vmatpush1.xpose.msra.mxu0 0.0
    %350 = vmatprep.subr.mxu0 0.0
    %351 = vmatpush1.xpose.msra.mxu0 0.0
    %352 = vmatprep.subr.mxu0 0.0
    %353 = vmatpush1.xpose.msra.mxu0 0.0
    %354 = vmatprep.subr.mxu0 0.0
    %355 = vmatpush1.xpose.msra.mxu0 0.0
    %356 = vmatprep.subr.mxu0 0.0
    %357 = vmatpush1.xpose.msra.mxu0 0.0
    %358 = vmatprep.subr.mxu0 0.0
    %359 = vmatpush1.xpose.msra.mxu0 0.0
    %360 = vmatprep.subr.mxu0 0.0
    %361 = vmatpush1.xpose.msra.mxu0 0.0
    %362 = vmatprep.subr.mxu0 0.0
    %363 = vmatpush1.xpose.msra.mxu0 0.0
    %364 = vmatprep.subr.mxu0 0.0
    %365 = vmatpush1.xpose.msra.mxu0 0.0
    %366 = vmatprep.subr.mxu0 0.0
    %367 = vmatpush1.xpose.msra.mxu0 0.0
    %368 = vmatprep.subr.mxu0 0.0
    %369 = vmatpush1.xpose.msra.mxu0 0.0
    %370 = vmatprep.subr.mxu0 0.0
    %371 = vmatpush1.xpose.msra.mxu0 0.0
    %372 = vmatprep.subr.mxu0 0.0
    %373 = vmatpush1.xpose.msra.mxu0 0.0
    %374 = vmatprep.subr.mxu0 0.0
    %375 = vmatpush1.xpose.msra.mxu0 0.0
    %376 = vmatprep.subr.mxu0 0.0
    %377 = vmatpush1.xpose.msra.mxu0 %v344
    %378 = vmatprep.subr.mxu0 0.0
    %379 = vmatpush2.xpose.msra.mxu0 0.0
    %380 = vmatprep.subr.mxu0 0.0
    %381 = vmatpush2.xpose.msra.mxu0 0.0
    %382 = vmatprep.subr.mxu0 0.0
    %383 = vmatpush2.xpose.msra.mxu0 0.0
    %384 = vmatprep.subr.mxu0 0.0
    %385 = vmatpush2.xpose.msra.mxu0 0.0
    %386 = vmatprep.subr.mxu0 0.0
    %387 = vmatpush2.xpose.msra.mxu0 0.0
    %388 = vmatprep.subr.mxu0 0.0
    %389 = vmatpush2.xpose.msra.mxu0 0.0
    %390 = vmatprep.subr.mxu0 0.0
    %391 = vmatpush2.xpose.msra.mxu0 0.0
    %392 = vmatprep.subr.mxu0 0.0
    %393 = vmatpush2.xpose.msra.mxu0 0.0
    %394 = vmatprep.subr.mxu0 0.0
    %395 = vmatpush2.xpose.msra.mxu0 0.0
    %396 = vmatprep.subr.mxu0 0.0
    %397 = vmatpush2.xpose.msra.mxu0 0.0
    %398 = vmatprep.subr.mxu0 0.0
    %399 = vmatpush2.xpose.msra.mxu0 0.0
    %400 = vmatprep.subr.mxu0 0.0
    %401 = vmatpush2.xpose.msra.mxu0 0.0
    %402 = vmatprep.subr.mxu0 0.0
    %403 = vmatpush2.xpose.msra.mxu0 0.0
    %404 = vmatprep.subr.mxu0 0.0
    %405 = vmatpush2.xpose.msra.mxu0 0.0
    %406 = vmatprep.subr.mxu0 0.0
    %407 = vmatpush2.xpose.msra.mxu0 0.0
    %408 = vmatprep.subr.mxu0 0.0
    %409 = vmatpush2.xpose.msra.mxu0 0.0
    %410 = vmatprep.mubr.f32.mxu0 0.0
    %411 = vmatmul.mubr.f32.gmra.mxu0 %v341
    %v412 = vpop.f32.mrf.mxu0
    %v413 = vadd.f32 %v338, %v412
    %v414 = vpop.f32.mrf.mxu0
    %415 = vdwg.mxu0
    %v416 = vxor.u32 %v413, 2147483648
    %v417 = vmul.f32 %v416, 1.442695
    %v418 = vpow.pop %v417
    %v419 = vadd.f32 %v418, 1.0
    %v420 = vrcp.pop %v419
    %v421 = vmul.f32 1.0, %v420
    %vm422 = vcmask 59392
    %v423 = vsel %vm422, %v421, 0.0
    %v424 = vrot.slane %v423, 4
    %v425 = vadd.f32 %v423, %v424
    %v426 = vrot.slane %v425, 2
    %v427 = vadd.f32 %v425, %v426
    %v428 = vrot.slane %v427, 1
    %v429 = vadd.f32 %v427, %v428
    %v430 = vmul.f32 %v429, 0.33333334
    %vm431 = vcmask 57344
    %432 = vst.msk [vmem:[#allocation8] sm:$0x1] %vm431, %v430
    // Predicated region
    $region50: #{qensemble_forward.1} parent=1 // pred_check
      _
    $region51: #{qensemble_forward.1} parent=1 // pred_check_branch
      %434 = sbr.rel (0) target = $region53
    $region52: #{qensemble_forward.1} parent=1 // pred_region
      %s436 = ssub.s32 16, 16
      %437 = vsyncadd [#allocation4], %s436
      %s439 = sshll.u32 [#allocation8], 4
      %s440 = int_to_ptr.vmem [resolvable:$true] %s439
      %442 = dma.vmem_to_hbm [thread:$0]  %s440, 16, %s9, [#allocation4]
    $region53: #{qensemble_forward.1} parent=1 // pred_fallthru
      _
    // Predicated region
    $region54: #{qensemble_forward.1} parent=1 // pred_check
      _
    $region55: #{qensemble_forward.1} parent=1 // pred_check_branch
      %444 = sbr.rel (0) target = $region57
    $region56: #{qensemble_forward.1} parent=1 // pred_region
      %445 = dma.done [#allocation4], 16
    $region57: #{qensemble_forward.1} parent=1 // pred_fallthru
      _
    %446 = vsyncpa [#allocation3], 1
    %447 = vsyncpa [#allocation6], 1
    %448 = vsyncpa [#allocation4], 1

</llo_original>
